<compile_context>
chip_gen: v6e
topology: v6e:2x2x1
jax: 0.10.0
libtpu: 0.0.40
codegen_flags: <defaults>
</compile_context>

<pallas_src>
import jax
import jax.numpy as jnp
from jax.experimental import pallas as pl
from jax.experimental.pallas import tpu as pltpu


# Contract the lane (last) dim of both operands: X @ A.T without building A.T.
_NT_DIMS = (((1,), (1,)), ((), ()))

_VMEM = pl.BlockSpec(memory_space=pltpu.MemorySpace.VMEM)
_SMEM = pl.BlockSpec(memory_space=pltpu.MemorySpace.SMEM)
_CPARAMS = pltpu.CompilerParams(vmem_limit_bytes=2 * 1024 * 1024)


# ----------------------------- Pallas kernels ------------------------------

def _grad_step0_kernel(u_ref, A_ref, ln_ref, l0_ref, y_out_ref, r_out_ref):
    # y  = (A @ vec(Ln)).T                              -> (1, N) row
    # R0 = vec(L0) + u0 * (A.T @ (y - A @ vec(L0))).T   -> (1, K) row
    A = A_ref[...]                                                  # (N, K)
    y = jax.lax.dot_general(ln_ref[...], A, _NT_DIMS,
                            preferred_element_type=jnp.float32)     # (1, N)
    av0 = jax.lax.dot_general(l0_ref[...], A, _NT_DIMS,
                              preferred_element_type=jnp.float32)   # (1, N)
    resid = y - av0                                                 # (1, N)
    g = jnp.dot(resid, A, preferred_element_type=jnp.float32)       # (1, K)
    y_out_ref[...] = y
    r_out_ref[...] = l0_ref[...] + u_ref[0] * g


def _svt_step_kernel(par_ref, rank_ref, s_ref, W_ref, rrow_ref, y_ref, A_ref,
                     lo_out_ref, rnext_out_ref):
    # Z_row     = sum_k s_k * vec(u_k v_k^T)  (rank-r truncation via mask)
    # Lo_row    = c * Z_row - a * R_row
    # R_next    = Lo_row + u_next * (A.T @ (y - A @ vec(Lo))).T
    c = par_ref[0]
    a = par_ref[1]
    u_next = par_ref[2]
    rank = rank_ref[0]

    s = s_ref[...]                                                  # (1, Kmin)
    idx = jax.lax.broadcasted_iota(jnp.int32, s.shape, 1)
    s_mask = jnp.where(idx < rank, s, 0.0)

    z_row = jnp.dot(s_mask, W_ref[...],
                    preferred_element_type=jnp.float32)             # (1, K)
    lo_row = c * z_row - a * rrow_ref[...]                          # (1, K)

    A = A_ref[...]                                                  # (N, K)
    av = jax.lax.dot_general(lo_row, A, _NT_DIMS,
                             preferred_element_type=jnp.float32)    # (1, N)
    resid = y_ref[...] - av                                         # (1, N)
    g = jnp.dot(resid, A, preferred_element_type=jnp.float32)       # (1, K)

    lo_out_ref[...] = lo_row
    rnext_out_ref[...] = lo_row + u_next * g


# ------------------------------ Pallas wrappers -----------------------------

def grad_step0(u0, A, ln_row, l0_row):
    N, K = A.shape
    return pl.pallas_call(
        _grad_step0_kernel,
        out_shape=(jax.ShapeDtypeStruct((1, N), jnp.float32),
                   jax.ShapeDtypeStruct((1, K), jnp.float32)),
        in_specs=[_SMEM, _VMEM, _VMEM, _VMEM],
        out_specs=(_VMEM, _VMEM),
        compiler_params=_CPARAMS,
        cost_estimate=pl.CostEstimate(
            flops=6 * N * K, transcendentals=0,
            bytes_accessed=4 * (N * K + 3 * K + 2 * N)),
    )(u0, A, ln_row, l0_row)


def svt_step(params, rank, s_row, W, r_row, y_row, A):
    N, K = A.shape
    Kmin = s_row.shape[1]
    return pl.pallas_call(
        _svt_step_kernel,
        out_shape=(jax.ShapeDtypeStruct((1, K), jnp.float32),
                   jax.ShapeDtypeStruct((1, K), jnp.float32)),
        in_specs=[_SMEM, _SMEM, _VMEM, _VMEM, _VMEM, _VMEM, _VMEM],
        out_specs=(_VMEM, _VMEM),
        compiler_params=_CPARAMS,
        cost_estimate=pl.CostEstimate(
            flops=2 * Kmin * K + 4 * N * K, transcendentals=0,
            bytes_accessed=4 * (N * K + Kmin * K + 4 * K + 2 * N + Kmin)),
    )(params, rank, s_row, W, r_row, y_row, A)


# --------------------------------- Module ----------------------------------

class SVT:
    def __init__(self, int_features, out_features, sigma, lay, key):
        self.int_features = int_features
        self.out_features = out_features
        self.sigma = float(sigma)
        self.lay = lay
        # parameters (same deterministic init values as the PyTorch __init__)
        self.u = 0.5 * jnp.ones((lay, 1), jnp.float32)
        self.a = 0.1 * jnp.ones((lay, 1), jnp.float32)
        self.c = 0.5 * jnp.ones((lay, 1), jnp.float32)
        # buffers
        k1, k2 = jax.random.split(key)
        K = int_features * out_features
        self.A = (jax.random.normal(k1, (int_features, K), jnp.float32)
                  / (K ** 0.5))
        self.mynoise = jax.random.normal(
            k2, (int_features, out_features), jnp.float32)
        self.L0 = jnp.zeros((int_features, out_features), jnp.float32)

    def forward(self, L, r):
        N, M = self.int_features, self.out_features
        K = N * M
        A = self.A

        # Observation + layer-0 gradient step fused in one kernel
        # (noise add is a trivial XLA elementwise op in the wrapper).
        Ln = L + self.sigma * self.mynoise
        ln_row = Ln.reshape(1, K)
        l0_row = self.L0.reshape(1, K)
        u0 = self.u[0].astype(jnp.float32)                    # (1,)
        y_row, r_row = grad_step0(u0, A, ln_row, l0_row)      # (1,N), (1,K)

        rank = jnp.array([r], jnp.int32)
        L_layer = []
        for layer in range(self.lay):
            R = r_row.reshape(N, M)
            # TODO(synk): torch.svd has no Pallas/TPU primitive; SVD computed
            # with jnp.linalg.svd between the Pallas kernels.
            U, s, Vh = jnp.linalg.svd(R, full_matrices=False)
            # Lane-dense outer-product basis W[k,:] = vec_row(u_k v_k^T):
            # wrapper-side layout plumbing so the kernel stays reshape-free.
            W = (U.T[:, :, None] * Vh[:, None, :]).reshape(-1, K)   # (Kmin, K)

            if layer + 1 < self.lay:
                u_next = self.u[layer + 1, 0]
            else:
                u_next = jnp.zeros((), jnp.float32)
            params = jnp.stack([self.c[layer, 0], self.a[layer, 0],
                                u_next]).astype(jnp.float32)

            lo_row, r_row = svt_step(params, rank, s.reshape(1, -1), W,
                                     r_row, y_row, A)
            L_layer.append(lo_row.reshape(N, M))
        return L_layer

    # pure-JAX reference, mirrors the PyTorch forward exactly
    def forward_ref(self, L, r):
        N, M = self.int_features, self.out_features
        K = N * M
        A = self.A
        Ln = L + self.sigma * self.mynoise
        y = A @ Ln.reshape(K, 1)
        Lo = self.L0
        outs = []
        for layer in range(self.lay):
            G = (A.T @ (y - A @ Lo.reshape(K, 1))).reshape(N, M)
            R = Lo + self.u[layer, 0] * G
            U, s, Vh = jnp.linalg.svd(R, full_matrices=False)
            Z = (U[:, :r] * s[:r]) @ Vh[:r, :]
            Lo = self.c[layer, 0] * Z - self.a[layer, 0] * R
            outs.append(Lo)
        return outs


# ----------------------------------- main -----------------------------------

if __name__ == "__main__":
    key = jax.random.PRNGKey(0)
    k_mod, k_L = jax.random.split(key)

    int_features, out_features = 16, 8
    sigma, lay, r = 0.1, 3, 3

    model = SVT(int_features, out_features, sigma, lay, k_mod)
    L = jax.random.normal(k_L, (int_features, out_features), jnp.float32)

    outs = model.forward(L, r)
    outs = jax.block_until_ready(outs)

    refs = model.forward_ref(L, r)
    for o, ref in zip(outs, refs):
        assert o.shape == (int_features, out_features)
        assert jnp.allclose(o, ref, rtol=1e-3, atol=1e-3), (
            float(jnp.max(jnp.abs(o - ref))))

    print("KERNEL_OK")
</pallas_src>

<mosaic_0001>
module attributes {stable_mosaic.version = 11 : i64} {
  func.func @_grad_step0_kernel(%arg0: memref<1xf32, #tpu.memory_space<smem>>, %arg1: memref<16x128xf32, #tpu.memory_space<vmem>>, %arg2: memref<1x128xf32, #tpu.memory_space<vmem>>, %arg3: memref<1x128xf32, #tpu.memory_space<vmem>>, %arg4: memref<1x16xf32, #tpu.memory_space<vmem>>, %arg5: memref<1x128xf32, #tpu.memory_space<vmem>>) attributes {dimension_semantics = [], scalar_prefetch = 0 : i64, scratch_operands = 0 : i64, tpu.core_type = #tpu.core_type<tc>} {
    %c0 = arith.constant 0 : index
    %c0_0 = arith.constant 0 : index
    %0 = vector.load %arg1[%c0, %c0_0] : memref<16x128xf32, #tpu.memory_space<vmem>>, vector<16x128xf32>
    %c0_1 = arith.constant 0 : index
    %c0_2 = arith.constant 0 : index
    %1 = vector.load %arg2[%c0_1, %c0_2] : memref<1x128xf32, #tpu.memory_space<vmem>>, vector<1x128xf32>
    %cst = arith.constant dense<0.000000e+00> : vector<1x16xf32>
    %2 = tpu.matmul %1, %0, %cst {dimension_numbers = #tpu.dot_dimension_numbers<[1], [1], [0], [0], [0, 0, 1, 0], [], []>} : vector<1x128xf32>, vector<16x128xf32>, vector<1x16xf32> -> vector<1x16xf32>
    %c0_3 = arith.constant 0 : index
    %c0_4 = arith.constant 0 : index
    %3 = vector.load %arg3[%c0_3, %c0_4] : memref<1x128xf32, #tpu.memory_space<vmem>>, vector<1x128xf32>
    %cst_5 = arith.constant dense<0.000000e+00> : vector<1x16xf32>
    %4 = tpu.matmul %3, %0, %cst_5 {dimension_numbers = #tpu.dot_dimension_numbers<[1], [1], [0], [0], [0, 0, 1, 0], [], []>} : vector<1x128xf32>, vector<16x128xf32>, vector<1x16xf32> -> vector<1x16xf32>
    %5 = arith.subf %2, %4 : vector<1x16xf32>
    %cst_6 = arith.constant dense<0.000000e+00> : vector<1x128xf32>
    %6 = tpu.matmul %5, %0, %cst_6 {dimension_numbers = #tpu.dot_dimension_numbers<[1], [0], [0], [1], [0, 0, 1, 1], [], []>} : vector<1x16xf32>, vector<16x128xf32>, vector<1x128xf32> -> vector<1x128xf32>
    %c0_7 = arith.constant 0 : index
    %c0_8 = arith.constant 0 : index
    %7 = vector.load %arg4[%c0_7, %c0_8] : memref<1x16xf32, #tpu.memory_space<vmem>>, vector<1x16xf32>
    tpu.vector_store %arg4[%c0_7, %c0_8], %2 {strides = array<i32>} : memref<1x16xf32, #tpu.memory_space<vmem>>, vector<1x16xf32>,
    %c0_9 = arith.constant 0 : index
    %c0_10 = arith.constant 0 : index
    %8 = vector.load %arg3[%c0_9, %c0_10] : memref<1x128xf32, #tpu.memory_space<vmem>>, vector<1x128xf32>
    %c0_11 = arith.constant 0 : index
    %9 = memref.load %arg0[%c0_11] : memref<1xf32, #tpu.memory_space<smem>>
    %10 = vector.broadcast %9 : f32 to vector<1x128xf32>
    %11 = arith.mulf %10, %6 : vector<1x128xf32>
    %12 = arith.addf %8, %11 : vector<1x128xf32>
    %c0_12 = arith.constant 0 : index
    %c0_13 = arith.constant 0 : index
    %13 = vector.load %arg5[%c0_12, %c0_13] : memref<1x128xf32, #tpu.memory_space<vmem>>, vector<1x128xf32>
    tpu.vector_store %arg5[%c0_12, %c0_13], %12 {strides = array<i32>} : memref<1x128xf32, #tpu.memory_space<vmem>>, vector<1x128xf32>,
    return
  }
}

</mosaic_0001>

<llo_original>
// kernel: tpu_custom_call.1
$region0: #{tpu_custom_call.1}
  #allocation0 [shape = 'u32[]', space=smem, size = 0x4, offset = 0x4, fixed_abs, tag = 'smem constant byte address 0x4 - core index']
  #allocation1 [shape = 'u32[144,128]{1,0:T(1,128)}', space=vmem, size = 0x12000, scoped, tag = 'internal scratch']
  #allocation2 [shape = 'f32[1]{0:T(128)S(6)}', space=smem, size = 0x200, scoped, tag = 'scoped memory for tpu_custom_call.1']
  %s0 = inlined_call_operand.<no memory space> [shape: f32[1], index: 0, kind: input, shape index: {}]
  %s1 = inlined_call_operand.hbm [shape: f32[16,128], index: 1, kind: input, shape index: {}]
  %s2 = inlined_call_operand.vmem [shape: f32[1,128], index: 2, kind: input, shape index: {}]
  %s3 = inlined_call_operand.vmem [shape: f32[1,128], index: 3, kind: input, shape index: {}]
  %s4 = inlined_call_operand.hbm [shape: f32[1,16], index: 4, kind: output, shape index: {0}]
  %s5 = inlined_call_operand.hbm [shape: f32[1,128], index: 5, kind: output, shape index: {1}]
  %6 = xla_tuple %s4, %s5
  %s7 = sld [smem:[#allocation0]]
  $region38: #{tpu_custom_call.1} parent=0
    _
  %s9 = ssub.s32 1, %s7
  %s10 = scalar_select 0, %s9, %s7
  %11 = sst [smem:[#allocation2]] %s0
  $region1: #{tpu_custom_call.1} parent=0
    #allocation3 [shape = 'u8[8192]{0}', space=vmem, size = 0x2000, scoped, tag = 'input window, operand 1, single buffered']
    #allocation4 [shape = 's32[1]{0}', space=sflag, size = 0x4, scoped, tag = 'scoped memory for tpu_custom_call.1']
    #allocation5 [shape = 's32[1]{0}', space=sflag, size = 0x4, scoped, tag = 'scoped memory for tpu_custom_call.1']
    #allocation6 [shape = 'u8[512]{0}', space=vmem, size = 0x400, scoped, tag = 'output window, operand 0, single buffered']
    #allocation7 [shape = 'u8[512]{0}', space=vmem, size = 0x400, scoped, tag = 'output window, operand 1, single buffered']
    #allocation8 [shape = 's32[1]{0}', space=sflag, size = 0x4, scoped, tag = 'scoped memory for tpu_custom_call.1']
    %12 = vsyncpa [#allocation4], 0
    %13 = vsyncpa [#allocation5], 0
    %14 = vsyncpa [#allocation8], 0
    // Predicated region
    $region2: #{tpu_custom_call.1} parent=1 // pred_check
      _
    $region3: #{tpu_custom_call.1} parent=1 // pred_check_branch
      %16 = sbr.rel (0) target = $region5
    $region4: #{tpu_custom_call.1} parent=1 // pred_region
      _
    $region5: #{tpu_custom_call.1} parent=1 // pred_fallthru
      _
    // Predicated region
    $region6: #{tpu_custom_call.1} parent=1 // pred_check
      _
    $region7: #{tpu_custom_call.1} parent=1 // pred_check_branch
      %18 = sbr.rel (0) target = $region9
    $region8: #{tpu_custom_call.1} parent=1 // pred_region
      %s20 = ssub.s32 256, 256
      %21 = vsyncadd [#allocation4], %s20
      %s22 = sshll.u32 [#allocation3], 4
      %s23 = int_to_ptr.vmem [resolvable:$true] %s22
      %28 = dma.hbm_to_vmem [thread:$0]  %s1, 256, %s23, [#allocation4], 128, 128, 8
    $region9: #{tpu_custom_call.1} parent=1 // pred_fallthru
      _
    // Predicated region
    $region10: #{tpu_custom_call.1} parent=1 // pred_check
      _
    $region11: #{tpu_custom_call.1} parent=1 // pred_check_branch
      %30 = sbr.rel (0) target = $region13
    $region12: #{tpu_custom_call.1} parent=1 // pred_region
      _
    $region13: #{tpu_custom_call.1} parent=1 // pred_fallthru
      _
    // Predicated region
    $region14: #{tpu_custom_call.1} parent=1 // pred_check
      _
    $region15: #{tpu_custom_call.1} parent=1 // pred_check_branch
      %32 = sbr.rel (0) target = $region17
    $region16: #{tpu_custom_call.1} parent=1 // pred_region
      _
    $region17: #{tpu_custom_call.1} parent=1 // pred_fallthru
      _
    // Predicated region
    $region18: #{tpu_custom_call.1} parent=1 // pred_check
      _
    $region19: #{tpu_custom_call.1} parent=1 // pred_check_branch
      %34 = sbr.rel (0) target = $region21
    $region20: #{tpu_custom_call.1} parent=1 // pred_region
      %35 = dma.done [#allocation4], 256
    $region21: #{tpu_custom_call.1} parent=1 // pred_fallthru
      _
    %v36 = vld [vmem:[#allocation3] sm:$0xff]
    %v37 = vld [vmem:[#allocation3 + $0x8] sm:$0xff]
    %v38 = vld [vmem:[%s2] sm:$0x1]
    %39 = vmatprep.subr.mxu0 0.0
    %40 = vmatpush1.xpose.msra.mxu0 0.0
    %41 = vmatprep.subr.mxu0 0.0
    %42 = vmatpush1.xpose.msra.mxu0 0.0
    %43 = vmatprep.subr.mxu0 0.0
    %44 = vmatpush1.xpose.msra.mxu0 0.0
    %45 = vmatprep.subr.mxu0 0.0
    %46 = vmatpush1.xpose.msra.mxu0 0.0
    %47 = vmatprep.subr.mxu0 0.0
    %48 = vmatpush1.xpose.msra.mxu0 0.0
    %49 = vmatprep.subr.mxu0 0.0
    %50 = vmatpush1.xpose.msra.mxu0 0.0
    %51 = vmatprep.subr.mxu0 0.0
    %52 = vmatpush1.xpose.msra.mxu0 0.0
    %53 = vmatprep.subr.mxu0 0.0
    %54 = vmatpush1.xpose.msra.mxu0 0.0
    %55 = vmatprep.subr.mxu0 0.0
    %56 = vmatpush1.xpose.msra.mxu0 0.0
    %57 = vmatprep.subr.mxu0 0.0
    %58 = vmatpush1.xpose.msra.mxu0 0.0
    %59 = vmatprep.subr.mxu0 0.0
    %60 = vmatpush1.xpose.msra.mxu0 0.0
    %61 = vmatprep.subr.mxu0 0.0
    %62 = vmatpush1.xpose.msra.mxu0 0.0
    %63 = vmatprep.subr.mxu0 0.0
    %64 = vmatpush1.xpose.msra.mxu0 0.0
    %65 = vmatprep.subr.mxu0 0.0
    %66 = vmatpush1.xpose.msra.mxu0 0.0
    %67 = vmatprep.subr.mxu0 0.0
    %68 = vmatpush1.xpose.msra.mxu0 %v37
    %69 = vmatprep.subr.mxu0 0.0
    %70 = vmatpush1.xpose.msra.mxu0 %v36
    %71 = vmatprep.subr.mxu0 0.0
    %72 = vmatpush2.xpose.msra.mxu0 0.0
    %73 = vmatprep.subr.mxu0 0.0
    %74 = vmatpush2.xpose.msra.mxu0 0.0
    %75 = vmatprep.subr.mxu0 0.0
    %76 = vmatpush2.xpose.msra.mxu0 0.0
    %77 = vmatprep.subr.mxu0 0.0
    %78 = vmatpush2.xpose.msra.mxu0 0.0
    %79 = vmatprep.subr.mxu0 0.0
    %80 = vmatpush2.xpose.msra.mxu0 0.0
    %81 = vmatprep.subr.mxu0 0.0
    %82 = vmatpush2.xpose.msra.mxu0 0.0
    %83 = vmatprep.subr.mxu0 0.0
    %84 = vmatpush2.xpose.msra.mxu0 0.0
    %85 = vmatprep.subr.mxu0 0.0
    %86 = vmatpush2.xpose.msra.mxu0 0.0
    %87 = vmatprep.subr.mxu0 0.0
    %88 = vmatpush2.xpose.msra.mxu0 0.0
    %89 = vmatprep.subr.mxu0 0.0
    %90 = vmatpush2.xpose.msra.mxu0 0.0
    %91 = vmatprep.subr.mxu0 0.0
    %92 = vmatpush2.xpose.msra.mxu0 0.0
    %93 = vmatprep.subr.mxu0 0.0
    %94 = vmatpush2.xpose.msra.mxu0 0.0
    %95 = vmatprep.subr.mxu0 0.0
    %96 = vmatpush2.xpose.msra.mxu0 0.0
    %97 = vmatprep.subr.mxu0 0.0
    %98 = vmatpush2.xpose.msra.mxu0 0.0
    %99 = vmatprep.subr.mxu0 0.0
    %100 = vmatpush2.xpose.msra.mxu0 0.0
    %101 = vmatprep.subr.mxu0 0.0
    %102 = vmatpush2.xpose.msra.mxu0 0.0
    %103 = vmatprep.mubr.f32.mxu0 0.0
    %104 = vmatmul.mubr.f32.gmra.mxu0 %v38
    %v105 = vpop.f32.mrf.mxu0
    %v106 = vadd.f32 0.0, %v105
    %v107 = vpop.f32.mrf.mxu0
    %108 = vdwg.mxu0
    %v109 = vld [vmem:[%s3] sm:$0x1]
    %110 = vmatprep.subr.mxu0 0.0
    %111 = vmatpush1.xpose.msra.mxu0 0.0
    %112 = vmatprep.subr.mxu0 0.0
    %113 = vmatpush1.xpose.msra.mxu0 0.0
    %114 = vmatprep.subr.mxu0 0.0
    %115 = vmatpush1.xpose.msra.mxu0 0.0
    %116 = vmatprep.subr.mxu0 0.0
    %117 = vmatpush1.xpose.msra.mxu0 0.0
    %118 = vmatprep.subr.mxu0 0.0
    %119 = vmatpush1.xpose.msra.mxu0 0.0
    %120 = vmatprep.subr.mxu0 0.0
    %121 = vmatpush1.xpose.msra.mxu0 0.0
    %122 = vmatprep.subr.mxu0 0.0
    %123 = vmatpush1.xpose.msra.mxu0 0.0
    %124 = vmatprep.subr.mxu0 0.0
    %125 = vmatpush1.xpose.msra.mxu0 0.0
    %126 = vmatprep.subr.mxu0 0.0
    %127 = vmatpush1.xpose.msra.mxu0 0.0
    %128 = vmatprep.subr.mxu0 0.0
    %129 = vmatpush1.xpose.msra.mxu0 0.0
    %130 = vmatprep.subr.mxu0 0.0
    %131 = vmatpush1.xpose.msra.mxu0 0.0
    %132 = vmatprep.subr.mxu0 0.0
    %133 = vmatpush1.xpose.msra.mxu0 0.0
    %134 = vmatprep.subr.mxu0 0.0
    %135 = vmatpush1.xpose.msra.mxu0 0.0
    %136 = vmatprep.subr.mxu0 0.0
    %137 = vmatpush1.xpose.msra.mxu0 0.0
    %138 = vmatprep.subr.mxu0 0.0
    %139 = vmatpush1.xpose.msra.mxu0 %v37
    %140 = vmatprep.subr.mxu0 0.0
    %141 = vmatpush1.xpose.msra.mxu0 %v36
    %142 = vmatprep.subr.mxu0 0.0
    %143 = vmatpush2.xpose.msra.mxu0 0.0
    %144 = vmatprep.subr.mxu0 0.0
    %145 = vmatpush2.xpose.msra.mxu0 0.0
    %146 = vmatprep.subr.mxu0 0.0
    %147 = vmatpush2.xpose.msra.mxu0 0.0
    %148 = vmatprep.subr.mxu0 0.0
    %149 = vmatpush2.xpose.msra.mxu0 0.0
    %150 = vmatprep.subr.mxu0 0.0
    %151 = vmatpush2.xpose.msra.mxu0 0.0
    %152 = vmatprep.subr.mxu0 0.0
    %153 = vmatpush2.xpose.msra.mxu0 0.0
    %154 = vmatprep.subr.mxu0 0.0
    %155 = vmatpush2.xpose.msra.mxu0 0.0
    %156 = vmatprep.subr.mxu0 0.0
    %157 = vmatpush2.xpose.msra.mxu0 0.0
    %158 = vmatprep.subr.mxu0 0.0
    %159 = vmatpush2.xpose.msra.mxu0 0.0
    %160 = vmatprep.subr.mxu0 0.0
    %161 = vmatpush2.xpose.msra.mxu0 0.0
    %162 = vmatprep.subr.mxu0 0.0
    %163 = vmatpush2.xpose.msra.mxu0 0.0
    %164 = vmatprep.subr.mxu0 0.0
    %165 = vmatpush2.xpose.msra.mxu0 0.0
    %166 = vmatprep.subr.mxu0 0.0
    %167 = vmatpush2.xpose.msra.mxu0 0.0
    %168 = vmatprep.subr.mxu0 0.0
    %169 = vmatpush2.xpose.msra.mxu0 0.0
    %170 = vmatprep.subr.mxu0 0.0
    %171 = vmatpush2.xpose.msra.mxu0 0.0
    %172 = vmatprep.subr.mxu0 0.0
    %173 = vmatpush2.xpose.msra.mxu0 0.0
    %174 = vmatprep.mubr.f32.mxu0 0.0
    %175 = vmatmul.mubr.f32.gmra.mxu0 %v109
    %v176 = vpop.f32.mrf.mxu0
    %v177 = vadd.f32 0.0, %v176
    %v178 = vpop.f32.mrf.mxu0
    %179 = vdwg.mxu0
    %v180 = vsub.f32 %v106, %v177
    %vm181 = vcmask 130048
    %v183 = vsel %vm181, %v180, 0
    %185 = vmatprep.subr.mxu0 0.0
    %186 = vmatpush1.msra.mxu0 0.0
    %187 = vmatprep.subr.mxu0 0.0
    %188 = vmatpush1.msra.mxu0 0.0
    %189 = vmatprep.subr.mxu0 0.0
    %190 = vmatpush1.msra.mxu0 0.0
    %191 = vmatprep.subr.mxu0 0.0
    %192 = vmatpush1.msra.mxu0 0.0
    %193 = vmatprep.subr.mxu0 0.0
    %194 = vmatpush1.msra.mxu0 0.0
    %195 = vmatprep.subr.mxu0 0.0
    %196 = vmatpush1.msra.mxu0 0.0
    %197 = vmatprep.subr.mxu0 0.0
    %198 = vmatpush1.msra.mxu0 0.0
    %199 = vmatprep.subr.mxu0 0.0
    %200 = vmatpush1.msra.mxu0 0.0
    %201 = vmatprep.subr.mxu0 0.0
    %202 = vmatpush1.msra.mxu0 0.0
    %203 = vmatprep.subr.mxu0 0.0
    %204 = vmatpush1.msra.mxu0 0.0
    %205 = vmatprep.subr.mxu0 0.0
    %206 = vmatpush1.msra.mxu0 0.0
    %207 = vmatprep.subr.mxu0 0.0
    %208 = vmatpush1.msra.mxu0 0.0
    %209 = vmatprep.subr.mxu0 0.0
    %210 = vmatpush1.msra.mxu0 0.0
    %211 = vmatprep.subr.mxu0 0.0
    %212 = vmatpush1.msra.mxu0 0.0
    %213 = vmatprep.subr.mxu0 0.0
    %214 = vmatpush1.msra.mxu0 %v37
    %215 = vmatprep.subr.mxu0 0.0
    %216 = vmatpush1.msra.mxu0 %v36
    %217 = vmatprep.subr.mxu0 0.0
    %218 = vmatpush2.msra.mxu0 0.0
    %219 = vmatprep.subr.mxu0 0.0
    %220 = vmatpush2.msra.mxu0 0.0
    %221 = vmatprep.subr.mxu0 0.0
    %222 = vmatpush2.msra.mxu0 0.0
    %223 = vmatprep.subr.mxu0 0.0
    %224 = vmatpush2.msra.mxu0 0.0
    %225 = vmatprep.subr.mxu0 0.0
    %226 = vmatpush2.msra.mxu0 0.0
    %227 = vmatprep.subr.mxu0 0.0
    %228 = vmatpush2.msra.mxu0 0.0
    %229 = vmatprep.subr.mxu0 0.0
    %230 = vmatpush2.msra.mxu0 0.0
    %231 = vmatprep.subr.mxu0 0.0
    %232 = vmatpush2.msra.mxu0 0.0
    %233 = vmatprep.subr.mxu0 0.0
    %234 = vmatpush2.msra.mxu0 0.0
    %235 = vmatprep.subr.mxu0 0.0
    %236 = vmatpush2.msra.mxu0 0.0
    %237 = vmatprep.subr.mxu0 0.0
    %238 = vmatpush2.msra.mxu0 0.0
    %239 = vmatprep.subr.mxu0 0.0
    %240 = vmatpush2.msra.mxu0 0.0
    %241 = vmatprep.subr.mxu0 0.0
    %242 = vmatpush2.msra.mxu0 0.0
    %243 = vmatprep.subr.mxu0 0.0
    %244 = vmatpush2.msra.mxu0 0.0
    %245 = vmatprep.subr.mxu0 0.0
    %246 = vmatpush2.msra.mxu0 0.0
    %247 = vmatprep.subr.mxu0 0.0
    %248 = vmatpush2.msra.mxu0 0.0
    %249 = vmatprep.mubr.f32.mxu0 0.0
    %250 = vmatmul.mubr.f32.gmra.mxu0 %v183
    %v251 = vpop.f32.mrf.mxu0
    %v252 = vadd.f32 0.0, %v251
    %v253 = vpop.f32.mrf.mxu0
    %254 = vdwg.mxu0
    %vm255 = vcmask 122880
    %256 = vst.msk [vmem:[#allocation6] sm:$0x1] %vm255, %v106
    %v257 = vld [vmem:[%s3] sm:$0x1]
    %s258 = sld [smem:[#allocation2]]
    %v259 = vstv %s258
    %v260 = vmul.f32 %v259, %v252
    %v261 = vadd.f32 %v257, %v260
    %262 = vst [vmem:[#allocation7] sm:$0x1] %v261
    // Predicated region
    $region22: #{tpu_custom_call.1} parent=1 // pred_check
      _
    $region23: #{tpu_custom_call.1} parent=1 // pred_check_branch
      %264 = sbr.rel (0) target = $region25
    $region24: #{tpu_custom_call.1} parent=1 // pred_region
      %s266 = ssub.s32 16, 16
      %267 = vsyncadd [#allocation5], %s266
      %s269 = sshll.u32 [#allocation6], 4
      %s270 = int_to_ptr.vmem [resolvable:$true] %s269
      %272 = dma.vmem_to_hbm [thread:$0]  %s270, 16, %s4, [#allocation5]
    $region25: #{tpu_custom_call.1} parent=1 // pred_fallthru
      _
    // Predicated region
    $region26: #{tpu_custom_call.1} parent=1 // pred_check
      _
    $region27: #{tpu_custom_call.1} parent=1 // pred_check_branch
      %274 = sbr.rel (0) target = $region29
    $region28: #{tpu_custom_call.1} parent=1 // pred_region
      %s276 = ssub.s32 16, 16
      %277 = vsyncadd [#allocation8], %s276
      %s279 = sshll.u32 [#allocation7], 4
      %s280 = int_to_ptr.vmem [resolvable:$true] %s279
      %282 = dma.vmem_to_hbm [thread:$0]  %s280, 16, %s5, [#allocation8]
    $region29: #{tpu_custom_call.1} parent=1 // pred_fallthru
      _
    // Predicated region
    $region30: #{tpu_custom_call.1} parent=1 // pred_check
      _
    $region31: #{tpu_custom_call.1} parent=1 // pred_check_branch
      %284 = sbr.rel (0) target = $region33
    $region32: #{tpu_custom_call.1} parent=1 // pred_region
      %285 = dma.done [#allocation5], 16
    $region33: #{tpu_custom_call.1} parent=1 // pred_fallthru
      _
    // Predicated region
    $region34: #{tpu_custom_call.1} parent=1 // pred_check
      _
    $region35: #{tpu_custom_call.1} parent=1 // pred_check_branch
      %287 = sbr.rel (0) target = $region37
    $region36: #{tpu_custom_call.1} parent=1 // pred_region
      %288 = dma.done [#allocation8], 16
    $region37: #{tpu_custom_call.1} parent=1 // pred_fallthru
      _
    %289 = vsyncpa [#allocation4], 1
    %290 = vsyncpa [#allocation5], 1
    %291 = vsyncpa [#allocation8], 1

</llo_original>
